<compile_context>
chip_gen: v7x
topology: tpu7x:2x2x1
jax: 0.10.0
libtpu: 0.0.40
codegen_flags: <defaults>
</compile_context>

<pallas_src>
import functools

import jax
import jax.numpy as jnp
from jax.experimental import pallas as pl
from jax.experimental.pallas import tpu as pltpu


def _round_up(x, m):
    return ((x + m - 1) // m) * m


def _neural_states_kernel(n_states, ns_pad, aug_ref, wh_ref, bh_ref, wpd_ref,
                          bpd_ref, out_ref):
    # aug_ref: (n_inputs, TM) -- flattened batch rows on the lane axis.
    aug = aug_ref[...]

    # hidden = relu(Wh @ aug + bh)                        -> (n_hidden, TM)
    h = jnp.dot(wh_ref[...], aug, preferred_element_type=jnp.float32)
    h = jnp.maximum(h + bh_ref[...], 0.0)

    # Fused, sublane-aligned production/degradation heads -> (2*ns_pad, TM)
    pd = jnp.dot(wpd_ref[...], h.astype(wpd_ref.dtype),
                 preferred_element_type=jnp.float32) + bpd_ref[...]
    pd = jax.nn.sigmoid(pd)

    prod = pd[:n_states, :]                    # sublane offset 0
    degr = pd[ns_pad:ns_pad + n_states, :]     # sublane-aligned offset

    # x is exactly the first n_states feature rows of aug.
    x = aug[:n_states, :].astype(jnp.float32)

    out_ref[...] = prod - degr * x             # (n_states, TM), lane-dense store


@functools.partial(jax.jit, static_argnames=("row_tile", "param_dtype"))
def neural_states_forward(x, constants, params, *, row_tile=8192,
                          param_dtype=jnp.float32):
    """x: [B, S, n_states], constants: [B, S, n_const] -> dx: [B, S, n_states]."""
    B, S, n_states = x.shape
    n_const = constants.shape[2]
    n_inputs = n_states + n_const
    ns_pad = _round_up(n_states, 8)

    wh, bh = params["states_hidden"]        # (n_hidden, n_inputs), (n_hidden,)
    wp, bp = params["states_production"]    # (n_states, n_hidden), (n_states,)
    wd, bd = params["states_degradation"]   # (n_states, n_hidden), (n_states,)
    n_hidden = wh.shape[0]

    # Fused production/degradation head; degradation rows start at the
    # sublane-aligned offset ns_pad (padding rows are zero and never read out).
    wpd = jnp.concatenate(
        [jnp.pad(wp, ((0, ns_pad - n_states), (0, 0))),
         jnp.pad(wd, ((0, ns_pad - n_states), (0, 0)))],
        axis=0).astype(param_dtype)                                  # (2*ns_pad, nh)
    bpd = jnp.concatenate(
        [jnp.pad(bp, (0, ns_pad - n_states)),
         jnp.pad(bd, (0, ns_pad - n_states))]).reshape(2 * ns_pad, 1)
    bpd = bpd.astype(jnp.float32)
    wh_p = wh.astype(param_dtype)                                    # (nh, ni)
    bh_p = bh.reshape(n_hidden, 1).astype(jnp.float32)

    # Feature-major layout: rows on the lane axis.  Choose the lane tile TM
    # (multiple of 128) so that total padding waste is < ~1 vreg-row per block
    # while blocks stay large enough to amortize per-grid-step overhead.
    M = B * S
    M128 = _round_up(M, 128)
    tm_target = _round_up(min(row_tile, M128), 128)
    n_blocks = -(-M128 // tm_target)
    TM = _round_up(-(-M128 // n_blocks), 128)
    M_pad = n_blocks * TM

    # concat + pad + transpose fused host-side into a single materialization.
    aug = jnp.concatenate(
        [x.reshape(M, n_states), constants.reshape(M, n_const)], axis=1)
    aug_t = jnp.pad(aug, ((0, M_pad - M), (0, 0))).T.astype(param_dtype)  # (ni, M_pad)

    kernel = functools.partial(_neural_states_kernel, n_states, ns_pad)

    def resident(shape):   # full-array blocks -> weights stay in VMEM for all steps
        return pl.BlockSpec(shape, lambda i: (0, 0))

    out_t = pl.pallas_call(
        kernel,
        out_shape=jax.ShapeDtypeStruct((n_states, M_pad), jnp.float32),
        grid=(n_blocks,),
        in_specs=[
            pl.BlockSpec((n_inputs, TM), lambda i: (0, i)),   # streamed activations
            resident(wh_p.shape),
            resident(bh_p.shape),
            resident(wpd.shape),
            resident(bpd.shape),
        ],
        out_specs=pl.BlockSpec((n_states, TM), lambda i: (0, i)),
        compiler_params=pltpu.CompilerParams(
            dimension_semantics=("parallel",)),
    )(aug_t, wh_p, bh_p, wpd, bpd)

    return out_t[:, :M].T.reshape(B, S, n_states)


def _xavier_uniform(key, out_dim, in_dim):
    bound = (6.0 / (in_dim + out_dim)) ** 0.5
    return jax.random.uniform(key, (out_dim, in_dim), jnp.float32, -bound, bound)


def _linear_bias(key, in_dim, out_dim):
    # PyTorch nn.Linear default bias init: U(-1/sqrt(fan_in), 1/sqrt(fan_in))
    bound = 1.0 / (in_dim ** 0.5)
    return jax.random.uniform(key, (out_dim,), jnp.float32, -bound, bound)


def init_neural_states_params(key, n_inputs, n_hidden, n_states):
    k = jax.random.split(key, 6)
    return {
        "states_hidden": (_xavier_uniform(k[0], n_hidden, n_inputs),
                          _linear_bias(k[1], n_inputs, n_hidden)),
        "states_production": (_xavier_uniform(k[2], n_states, n_hidden),
                              _linear_bias(k[3], n_hidden, n_states)),
        "states_degradation": (_xavier_uniform(k[4], n_states, n_hidden),
                               _linear_bias(k[5], n_hidden, n_states)),
    }


def _reference_forward(x, constants, params):
    wh, bh = params["states_hidden"]
    wp, bp = params["states_production"]
    wd, bd = params["states_degradation"]
    aug = jnp.concatenate([x, constants], axis=2)
    hidden = jax.nn.relu(aug @ wh.T + bh)
    dx = jax.nn.sigmoid(hidden @ wp.T + bp) - jax.nn.sigmoid(hidden @ wd.T + bd) * x
    return dx


if __name__ == "__main__":
    # Small shapes consistent with the module's forward.
    B, S = 2, 8
    n_states = 4          # x:         [B, S, n_states]
    n_const = 4           # constants: [B, S, n_const]
    n_inputs = n_states + n_const
    n_hidden = 32
    n_latents = 2         # unused in forward; kept for module-shape parity

    key = jax.random.PRNGKey(0)
    kx, kc, kp = jax.random.split(key, 3)
    x = jax.random.normal(kx, (B, S, n_states), jnp.float32)
    constants = jax.random.normal(kc, (B, S, n_const), jnp.float32)
    params = init_neural_states_params(kp, n_inputs, n_hidden, n_states)

    dx_ref = _reference_forward(x, constants, params)

    # f32 path (matches reference; v5e-friendly elementwise math).
    dx = jax.block_until_ready(neural_states_forward(x, constants, params))
    assert dx.shape == (B, S, n_states)
    assert jnp.allclose(dx, dx_ref, atol=1e-5, rtol=1e-5)

    # bf16 MXU-input path (v6e / v7x bandwidth optimization), looser tolerance.
    dx_bf16 = jax.block_until_ready(
        neural_states_forward(x, constants, params, param_dtype=jnp.bfloat16))
    assert jnp.allclose(dx_bf16, dx_ref, atol=5e-2, rtol=5e-2)

    # TODO(synk): summaries() (TensorBoard logging) is a training-time utility,
    # not part of the forward pass, and is intentionally not translated.
    print("KERNEL_OK")
</pallas_src>

<mosaic_0001>
module attributes {stable_mosaic.version = 11 : i64} {
  func.func @_neural_states_kernel(%arg0: i32, %arg1: memref<8x128xf32, #tpu.memory_space<vmem>>, %arg2: memref<32x8xf32, #tpu.memory_space<vmem>>, %arg3: memref<32x1xf32, #tpu.memory_space<vmem>>, %arg4: memref<16x32xf32, #tpu.memory_space<vmem>>, %arg5: memref<16x1xf32, #tpu.memory_space<vmem>>, %arg6: memref<4x128xf32, #tpu.memory_space<vmem>>) attributes {dimension_semantics = [#tpu.dimension_semantics<parallel>], iteration_bounds = array<i64: 1>, scalar_prefetch = 0 : i64, scratch_operands = 0 : i64, tpu.core_type = #tpu.core_type<tc>, window_params = [{transform_indices = @transform_0, window_bounds = array<i64: 8, 128>}, {pipeline_mode = #tpu.pipeline_mode<synchronous>, transform_indices = @transform_1, window_bounds = array<i64: 32, 8>}, {pipeline_mode = #tpu.pipeline_mode<synchronous>, transform_indices = @transform_2, window_bounds = array<i64: 32, 1>}, {pipeline_mode = #tpu.pipeline_mode<synchronous>, transform_indices = @transform_3, window_bounds = array<i64: 16, 32>}, {pipeline_mode = #tpu.pipeline_mode<synchronous>, transform_indices = @transform_4, window_bounds = array<i64: 16, 1>}, {transform_indices = @transform_5, window_bounds = array<i64: 4, 128>}]} {
    %c0 = arith.constant 0 : index
    %c0_0 = arith.constant 0 : index
    %0 = vector.load %arg1[%c0, %c0_0] : memref<8x128xf32, #tpu.memory_space<vmem>>, vector<8x128xf32>
    %c0_1 = arith.constant 0 : index
    %c0_2 = arith.constant 0 : index
    %1 = vector.load %arg2[%c0_1, %c0_2] : memref<32x8xf32, #tpu.memory_space<vmem>>, vector<32x8xf32>
    %cst = arith.constant dense<0.000000e+00> : vector<32x128xf32>
    %2 = tpu.matmul %1, %0, %cst {dimension_numbers = #tpu.dot_dimension_numbers<[1], [0], [0], [1], [0, 0, 1, 1], [], []>} : vector<32x8xf32>, vector<8x128xf32>, vector<32x128xf32> -> vector<32x128xf32>
    %c0_3 = arith.constant 0 : index
    %c0_4 = arith.constant 0 : index
    %3 = vector.load %arg3[%c0_3, %c0_4] : memref<32x1xf32, #tpu.memory_space<vmem>>, vector<32x1xf32>
    %4 = vector.broadcast %3 : vector<32x1xf32> to vector<32x128xf32>
    %5 = arith.addf %2, %4 : vector<32x128xf32>
    %cst_5 = arith.constant 0.000000e+00 : f32
    %6 = vector.broadcast %cst_5 : f32 to vector<32x128xf32>
    %7 = arith.maximumf %5, %6 : vector<32x128xf32>
    %c0_6 = arith.constant 0 : index
    %c0_7 = arith.constant 0 : index
    %8 = vector.load %arg4[%c0_6, %c0_7] : memref<16x32xf32, #tpu.memory_space<vmem>>, vector<16x32xf32>
    %cst_8 = arith.constant dense<0.000000e+00> : vector<16x128xf32>
    %9 = tpu.matmul %8, %7, %cst_8 {dimension_numbers = #tpu.dot_dimension_numbers<[1], [0], [0], [1], [0, 0, 1, 1], [], []>} : vector<16x32xf32>, vector<32x128xf32>, vector<16x128xf32> -> vector<16x128xf32>
    %c0_9 = arith.constant 0 : index
    %c0_10 = arith.constant 0 : index
    %10 = vector.load %arg5[%c0_9, %c0_10] : memref<16x1xf32, #tpu.memory_space<vmem>>, vector<16x1xf32>
    %11 = vector.broadcast %10 : vector<16x1xf32> to vector<16x128xf32>
    %12 = arith.addf %9, %11 : vector<16x128xf32>
    %13 = arith.negf %12 : vector<16x128xf32>
    %14 = math.exp %13 : vector<16x128xf32>
    %cst_11 = arith.constant 1.000000e+00 : f32
    %15 = vector.broadcast %cst_11 : f32 to vector<16x128xf32>
    %16 = arith.addf %15, %14 : vector<16x128xf32>
    %17 = arith.divf %15, %16 : vector<16x128xf32>
    %18 = vector.extract_strided_slice %17 {offsets = [0, 0], sizes = [4, 128], strides = [1, 1]} : vector<16x128xf32> to vector<4x128xf32>
    %19 = vector.extract_strided_slice %17 {offsets = [8, 0], sizes = [4, 128], strides = [1, 1]} : vector<16x128xf32> to vector<4x128xf32>
    %20 = vector.extract_strided_slice %0 {offsets = [0, 0], sizes = [4, 128], strides = [1, 1]} : vector<8x128xf32> to vector<4x128xf32>
    %21 = arith.mulf %19, %20 : vector<4x128xf32>
    %22 = arith.subf %18, %21 : vector<4x128xf32>
    %c0_12 = arith.constant 0 : index
    %c0_13 = arith.constant 0 : index
    %23 = vector.load %arg6[%c0_12, %c0_13] : memref<4x128xf32, #tpu.memory_space<vmem>>, vector<4x128xf32>
    tpu.vector_store %arg6[%c0_12, %c0_13], %22 {strides = array<i32>} : memref<4x128xf32, #tpu.memory_space<vmem>>, vector<4x128xf32>,
    return
  }
  func.func @transform_0(%arg0: i32) -> (i32, i32) {
    %c0_i32 = arith.constant 0 : i32
    %c0_i32_0 = arith.constant 0 : i32
    return %c0_i32, %arg0 : i32, i32
  }
  func.func @transform_1(%arg0: i32) -> (i32, i32) {
    %c0_i32 = arith.constant 0 : i32
    %c0_i32_0 = arith.constant 0 : i32
    %c0_i32_1 = arith.constant 0 : i32
    return %c0_i32, %c0_i32_0 : i32, i32
  }
  func.func @transform_2(%arg0: i32) -> (i32, i32) {
    %c0_i32 = arith.constant 0 : i32
    %c0_i32_0 = arith.constant 0 : i32
    %c0_i32_1 = arith.constant 0 : i32
    return %c0_i32, %c0_i32_0 : i32, i32
  }
  func.func @transform_3(%arg0: i32) -> (i32, i32) {
    %c0_i32 = arith.constant 0 : i32
    %c0_i32_0 = arith.constant 0 : i32
    %c0_i32_1 = arith.constant 0 : i32
    return %c0_i32, %c0_i32_0 : i32, i32
  }
  func.func @transform_4(%arg0: i32) -> (i32, i32) {
    %c0_i32 = arith.constant 0 : i32
    %c0_i32_0 = arith.constant 0 : i32
    %c0_i32_1 = arith.constant 0 : i32
    return %c0_i32, %c0_i32_0 : i32, i32
  }
  func.func @transform_5(%arg0: i32) -> (i32, i32) {
    %c0_i32 = arith.constant 0 : i32
    %c0_i32_0 = arith.constant 0 : i32
    return %c0_i32, %arg0 : i32, i32
  }
}

</mosaic_0001>

<llo_original>
// kernel: neural_states_forward.1
$region0: #{neural_states_forward.1}
  #allocation0 [shape = 'u32[]', space=smem, size = 0x4, offset = 0x4, fixed_abs, tag = 'smem constant byte address 0x4 - core index']
  #allocation1 [shape = 'u32[144,128]{1,0:T(1,128)}', space=vmem, size = 0x12000, scoped, tag = 'internal scratch']
  %s0 = inlined_call_operand.vmem [shape: f32[8,128], index: 0, kind: input, shape index: {}]
  %s1 = inlined_call_operand.vmem [shape: f32[32,8], index: 1, kind: input, shape index: {}]
  %s2 = inlined_call_operand.vmem [shape: f32[32,1], index: 2, kind: input, shape index: {}]
  %s3 = inlined_call_operand.vmem [shape: f32[16,32], index: 3, kind: input, shape index: {}]
  %s4 = inlined_call_operand.vmem [shape: f32[16,1], index: 4, kind: input, shape index: {}]
  %s5 = inlined_call_operand.vmem [shape: f32[4,128], index: 5, kind: output, shape index: {}]
  %s6 = sld [smem:[#allocation0]]
  $region30: #{neural_states_forward.1} parent=0
    _
  %s8 = ssub.s32 1, %s6
  %s9 = scalar_select 0, %s8, %s6
  // Predicated region
  $region2: #{neural_states_forward.1} parent=0 // pred_check
    _
  $region3: #{neural_states_forward.1} parent=0 // pred_check_branch
    %11 = sbr.rel (0) target = $region5
  $region4: #{neural_states_forward.1} parent=0 // pred_region
    _
  $region5: #{neural_states_forward.1} parent=0 // pred_fallthru
    _
  // Predicated region
  $region6: #{neural_states_forward.1} parent=0 // pred_check
    _
  $region7: #{neural_states_forward.1} parent=0 // pred_check_branch
    %13 = sbr.rel (0) target = $region9
  $region8: #{neural_states_forward.1} parent=0 // pred_region
    _
  $region9: #{neural_states_forward.1} parent=0 // pred_fallthru
    _
  // Predicated region
  $region10: #{neural_states_forward.1} parent=0 // pred_check
    _
  $region11: #{neural_states_forward.1} parent=0 // pred_check_branch
    %15 = sbr.rel (0) target = $region13
  $region12: #{neural_states_forward.1} parent=0 // pred_region
    _
  $region13: #{neural_states_forward.1} parent=0 // pred_fallthru
    _
  // Predicated region
  $region14: #{neural_states_forward.1} parent=0 // pred_check
    _
  $region15: #{neural_states_forward.1} parent=0 // pred_check_branch
    %17 = sbr.rel (0) target = $region17
  $region16: #{neural_states_forward.1} parent=0 // pred_region
    _
  $region17: #{neural_states_forward.1} parent=0 // pred_fallthru
    _
  // Predicated region
  $region18: #{neural_states_forward.1} parent=0 // pred_check
    _
  $region19: #{neural_states_forward.1} parent=0 // pred_check_branch
    %19 = sbr.rel (0) target = $region21
  $region20: #{neural_states_forward.1} parent=0 // pred_region
    _
  $region21: #{neural_states_forward.1} parent=0 // pred_fallthru
    _
  %v20 = vld [vmem:[%s0] sm:$0xff]
  %v21 = vld [vmem:[%s1] sm:$0xff]
  %v22 = vld [vmem:[%s1 + $0x8] sm:$0xff]
  %v23 = vld [vmem:[%s1 + $0x10] sm:$0xff]
  %v24 = vld [vmem:[%s1 + $0x18] sm:$0xff]
  %v25 = vld [vmem:[%s2] sm:$0xff]
  %v26 = vld [vmem:[%s2 + $0x8] sm:$0xff]
  %v27 = vld [vmem:[%s2 + $0x10] sm:$0xff]
  %v28 = vld [vmem:[%s2 + $0x18] sm:$0xff]
  %30 = vset.pattern.permute.xlu0 0
  %31 = vperm.xlu0 %30, %v25
  %v32 = vpop.permute.xlu0 %31
  %35 = vset.pattern.permute.xlu0 0
  %36 = vperm.xlu0 %35, %v26
  %v37 = vpop.permute.xlu0 %36
  %40 = vset.pattern.permute.xlu0 0
  %41 = vperm.xlu0 %40, %v27
  %v42 = vpop.permute.xlu0 %41
  %45 = vset.pattern.permute.xlu0 0
  %46 = vperm.xlu0 %45, %v28
  %v47 = vpop.permute.xlu0 %46
  %vm49 = vcmask 64512
  %v51 = vsel %vm49, %v21, 0
  %v54 = vsel %vm49, %v22, 0
  %v57 = vsel %vm49, %v23, 0
  %v60 = vsel %vm49, %v24, 0
  %62 = vmatprep.subr.mxu0 0.0
  %63 = vmatpush1.msra.mxu0 %v20
  %64 = vmatprep.subr.mxu0 0.0
  %65 = vmatpush1.msra.mxu0 0.0
  %66 = vmatprep.subr.mxu0 0.0
  %67 = vmatpush1.msra.mxu0 0.0
  %68 = vmatprep.subr.mxu0 0.0
  %69 = vmatpush1.msra.mxu0 0.0
  %70 = vmatprep.subr.mxu0 0.0
  %71 = vmatpush1.msra.mxu0 0.0
  %72 = vmatprep.subr.mxu0 0.0
  %73 = vmatpush1.msra.mxu0 0.0
  %74 = vmatprep.subr.mxu0 0.0
  %75 = vmatpush1.msra.mxu0 0.0
  %76 = vmatprep.subr.mxu0 0.0
  %77 = vmatpush1.msra.mxu0 0.0
  %78 = vmatprep.subr.mxu0 0.0
  %79 = vmatpush1.msra.mxu0 0.0
  %80 = vmatprep.subr.mxu0 0.0
  %81 = vmatpush1.msra.mxu0 0.0
  %82 = vmatprep.subr.mxu0 0.0
  %83 = vmatpush1.msra.mxu0 0.0
  %84 = vmatprep.subr.mxu0 0.0
  %85 = vmatpush1.msra.mxu0 0.0
  %86 = vmatprep.subr.mxu0 0.0
  %87 = vmatpush1.msra.mxu0 0.0
  %88 = vmatprep.subr.mxu0 0.0
  %89 = vmatpush1.msra.mxu0 0.0
  %90 = vmatprep.subr.mxu0 0.0
  %91 = vmatpush1.msra.mxu0 0.0
  %92 = vmatprep.subr.mxu0 0.0
  %93 = vmatpush1.msra.mxu0 0.0
  %94 = vmatprep.subr.mxu0 0.0
  %95 = vmatpush1.msra.mxu0 0.0
  %96 = vmatprep.subr.mxu0 0.0
  %97 = vmatpush1.msra.mxu0 0.0
  %98 = vmatprep.subr.mxu0 0.0
  %99 = vmatpush1.msra.mxu0 0.0
  %100 = vmatprep.subr.mxu0 0.0
  %101 = vmatpush1.msra.mxu0 0.0
  %102 = vmatprep.subr.mxu0 0.0
  %103 = vmatpush1.msra.mxu0 0.0
  %104 = vmatprep.subr.mxu0 0.0
  %105 = vmatpush1.msra.mxu0 0.0
  %106 = vmatprep.subr.mxu0 0.0
  %107 = vmatpush1.msra.mxu0 0.0
  %108 = vmatprep.subr.mxu0 0.0
  %109 = vmatpush1.msra.mxu0 0.0
  %110 = vmatprep.subr.mxu0 0.0
  %111 = vmatpush1.msra.mxu0 0.0
  %112 = vmatprep.subr.mxu0 0.0
  %113 = vmatpush1.msra.mxu0 0.0
  %114 = vmatprep.subr.mxu0 0.0
  %115 = vmatpush1.msra.mxu0 0.0
  %116 = vmatprep.subr.mxu0 0.0
  %117 = vmatpush1.msra.mxu0 0.0
  %118 = vmatprep.subr.mxu0 0.0
  %119 = vmatpush1.msra.mxu0 0.0
  %120 = vmatprep.subr.mxu0 0.0
  %121 = vmatpush1.msra.mxu0 0.0
  %122 = vmatprep.subr.mxu0 0.0
  %123 = vmatpush1.msra.mxu0 0.0
  %124 = vmatprep.subr.mxu0 0.0
  %125 = vmatpush1.msra.mxu0 0.0
  %126 = vmatprep.mubr.f32.mxu0 0.0
  %127 = vmatmul.mubr.f32.gmra.mrb[0].mxu0 %v51
  %v128 = vpop.f32.mrb[0].mxu0
  %v129 = vadd.f32 %v32, %v128
  %v130 = vpop.f32.mrb[0].mxu0
  %131 = vmatprep.mubr.f32.mxu0 0.0
  %132 = vmatmul.mubr.f32.gmra.mrb[0].mxu0 %v54
  %v133 = vpop.f32.mrb[0].mxu0
  %v134 = vadd.f32 %v37, %v133
  %v135 = vpop.f32.mrb[0].mxu0
  %136 = vmatprep.mubr.f32.mxu0 0.0
  %137 = vmatmul.mubr.f32.gmra.mrb[0].mxu0 %v57
  %v138 = vpop.f32.mrb[0].mxu0
  %v139 = vadd.f32 %v42, %v138
  %v140 = vpop.f32.mrb[0].mxu0
  %141 = vmatprep.mubr.f32.mxu0 0.0
  %142 = vmatmul.mubr.f32.gmra.mrb[0].mxu0 %v60
  %v143 = vpop.f32.mrb[0].mxu0
  %v144 = vadd.f32 %v47, %v143
  %v145 = vpop.f32.mrb[0].mxu0
  %146 = vdwg.mxu0
  %v147 = vmax.f32 %v129, 0.0
  %v148 = vmax.f32 %v134, 0.0
  %v149 = vmax.f32 %v139, 0.0
  %v150 = vmax.f32 %v144, 0.0
  %v151 = vld [vmem:[%s3] sm:$0xff]
  %v152 = vld [vmem:[%s3 + $0x8] sm:$0xff]
  %v153 = vld [vmem:[%s4] sm:$0xff]
  %v154 = vld [vmem:[%s4 + $0x8] sm:$0xff]
  %156 = vset.pattern.permute.xlu0 0
  %157 = vperm.xlu0 %156, %v153
  %v158 = vpop.permute.xlu0 %157
  %161 = vset.pattern.permute.xlu0 0
  %162 = vperm.xlu0 %161, %v154
  %v163 = vpop.permute.xlu0 %162
  %vm165 = vcmask 261120
  %v167 = vsel %vm165, %v151, 0
  %v170 = vsel %vm165, %v152, 0
  %172 = vmatprep.subr.mxu0 0.0
  %173 = vmatpush1.msra.mxu0 %v147
  %174 = vmatprep.subr.mxu0 0.0
  %175 = vmatpush1.msra.mxu0 %v148
  %176 = vmatprep.subr.mxu0 0.0
  %177 = vmatpush1.msra.mxu0 %v149
  %178 = vmatprep.subr.mxu0 0.0
  %179 = vmatpush1.msra.mxu0 %v150
  %180 = vmatprep.subr.mxu0 0.0
  %181 = vmatpush1.msra.mxu0 0.0
  %182 = vmatprep.subr.mxu0 0.0
  %183 = vmatpush1.msra.mxu0 0.0
  %184 = vmatprep.subr.mxu0 0.0
  %185 = vmatpush1.msra.mxu0 0.0
  %186 = vmatprep.subr.mxu0 0.0
  %187 = vmatpush1.msra.mxu0 0.0
  %188 = vmatprep.subr.mxu0 0.0
  %189 = vmatpush1.msra.mxu0 0.0
  %190 = vmatprep.subr.mxu0 0.0
  %191 = vmatpush1.msra.mxu0 0.0
  %192 = vmatprep.subr.mxu0 0.0
  %193 = vmatpush1.msra.mxu0 0.0
  %194 = vmatprep.subr.mxu0 0.0
  %195 = vmatpush1.msra.mxu0 0.0
  %196 = vmatprep.subr.mxu0 0.0
  %197 = vmatpush1.msra.mxu0 0.0
  %198 = vmatprep.subr.mxu0 0.0
  %199 = vmatpush1.msra.mxu0 0.0
  %200 = vmatprep.subr.mxu0 0.0
  %201 = vmatpush1.msra.mxu0 0.0
  %202 = vmatprep.subr.mxu0 0.0
  %203 = vmatpush1.msra.mxu0 0.0
  %204 = vmatprep.subr.mxu0 0.0
  %205 = vmatpush1.msra.mxu0 0.0
  %206 = vmatprep.subr.mxu0 0.0
  %207 = vmatpush1.msra.mxu0 0.0
  %208 = vmatprep.subr.mxu0 0.0
  %209 = vmatpush1.msra.mxu0 0.0
  %210 = vmatprep.subr.mxu0 0.0
  %211 = vmatpush1.msra.mxu0 0.0
  %212 = vmatprep.subr.mxu0 0.0
  %213 = vmatpush1.msra.mxu0 0.0
  %214 = vmatprep.subr.mxu0 0.0
  %215 = vmatpush1.msra.mxu0 0.0
  %216 = vmatprep.subr.mxu0 0.0
  %217 = vmatpush1.msra.mxu0 0.0
  %218 = vmatprep.subr.mxu0 0.0
  %219 = vmatpush1.msra.mxu0 0.0
  %220 = vmatprep.subr.mxu0 0.0
  %221 = vmatpush1.msra.mxu0 0.0
  %222 = vmatprep.subr.mxu0 0.0
  %223 = vmatpush1.msra.mxu0 0.0
  %224 = vmatprep.subr.mxu0 0.0
  %225 = vmatpush1.msra.mxu0 0.0
  %226 = vmatprep.subr.mxu0 0.0
  %227 = vmatpush1.msra.mxu0 0.0
  %228 = vmatprep.subr.mxu0 0.0
  %229 = vmatpush1.msra.mxu0 0.0
  %230 = vmatprep.subr.mxu0 0.0
  %231 = vmatpush1.msra.mxu0 0.0
  %232 = vmatprep.subr.mxu0 0.0
  %233 = vmatpush1.msra.mxu0 0.0
  %234 = vmatprep.subr.mxu0 0.0
  %235 = vmatpush1.msra.mxu0 0.0
  %236 = vmatprep.mubr.f32.mxu0 0.0
  %237 = vmatmul.mubr.f32.gmra.mrb[0].mxu0 %v167
  %v238 = vpop.f32.mrb[0].mxu0
  %v239 = vadd.f32 %v158, %v238
  %v240 = vpop.f32.mrb[0].mxu0
  %241 = vmatprep.mubr.f32.mxu0 0.0
  %242 = vmatmul.mubr.f32.gmra.mrb[0].mxu0 %v170
  %v243 = vpop.f32.mrb[0].mxu0
  %v244 = vadd.f32 %v163, %v243
  %v245 = vpop.f32.mrb[0].mxu0
  %246 = vdwg.mxu0
  %v247 = vxor.u32 %v239, 2147483648
  %v248 = vxor.u32 %v244, 2147483648
  %v249 = vmul.f32 %v247, 1.442695
  %v250 = vpow.pop %v249
  %v251 = vmul.f32 %v248, 1.442695
  %v252 = vpow.pop %v251
  %v253 = vadd.f32 %v250, 1.0
  %v254 = vadd.f32 %v252, 1.0
  %v255 = vrcp.pop %v253
  %v256 = vmul.f32 1.0, %v255
  %v257 = vrcp.pop %v254
  %v258 = vmul.f32 1.0, %v257
  %v259 = vmul.f32 %v258, %v20
  %v260 = vsub.f32 %v256, %v259
  %261 = vst [vmem:[%s5] sm:$0xf] %v260
  // Predicated region
  $region22: #{neural_states_forward.1} parent=0 // pred_check
    _
  $region23: #{neural_states_forward.1} parent=0 // pred_check_branch
    %263 = sbr.rel (0) target = $region25
  $region24: #{neural_states_forward.1} parent=0 // pred_region
    _
  $region25: #{neural_states_forward.1} parent=0 // pred_fallthru
    _
  // Predicated region
  $region26: #{neural_states_forward.1} parent=0 // pred_check
    _
  $region27: #{neural_states_forward.1} parent=0 // pred_check_branch
    %265 = sbr.rel (0) target = $region29
  $region28: #{neural_states_forward.1} parent=0 // pred_region
    _
  $region29: #{neural_states_forward.1} parent=0 // pred_fallthru
    _

</llo_original>
